<compile_context>
chip_gen: v5e
topology: v5e:2x2
jax: 0.10.0
libtpu: 0.0.40
codegen_flags: <defaults>
</compile_context>

<pallas_src>
import functools

import jax
import jax.numpy as jnp
from jax.experimental import pallas as pl
from jax.experimental.pallas import tpu as pltpu


def _fold_rows(elt, out_rows):
    """Collapse a (rows, C) f32 tile into an (out_rows, C) partial sum.

    out_rows == 8: rows is a multiple of 8; the reshape splits the sublane dim
    into vreg-sized groups of 8 and the axis-0 sum lowers to elementwise vreg
    adds on the VPU.  out_rows == 1: single-full-block fallback when rows is
    not a multiple of 8 (one sublane reduce for the whole call; negligible).
    """
    rows, c = elt.shape
    if out_rows == 8:
        if rows == 8:
            return elt
        return jnp.sum(elt.reshape(rows // 8, 8, c), axis=0)
    return jnp.sum(elt, axis=0, keepdims=True)


def _huber_partial_kernel(x_ref, y_ref, o_ref, *, delta, n_rows, tile_rows,
                          out_rows, needs_mask):
    """Grid = (row-tiles,).  o_ref is a resident (out_rows, C) f32 partial sum."""
    i = pl.program_id(0)

    @pl.when(i == 0)
    def _():
        o_ref[...] = jnp.zeros_like(o_ref)

    x = x_ref[...].astype(jnp.float32)
    y = y_ref[...].astype(jnp.float32)
    t = jnp.abs(x - y)
    # Branch-free Huber: q = min(t, delta); q*(t - q/2)
    #   t <= delta -> 0.5*t^2 ;  t > delta -> delta*(t - delta/2)
    q = jnp.minimum(t, delta)
    elt = q * (t - 0.5 * q)

    if needs_mask:
        last = pl.num_programs(0) - 1

        @pl.when(i != last)
        def _():  # interior tiles: no mask ops at all
            o_ref[...] += _fold_rows(elt, out_rows)

        @pl.when(i == last)
        def _():  # only the last tile overhangs past n_rows
            rows = i * tile_rows + jax.lax.broadcasted_iota(
                jnp.int32, elt.shape, 0)
            masked = jnp.where(rows < n_rows, elt, 0.0)
            o_ref[...] += _fold_rows(masked, out_rows)
    else:
        o_ref[...] += _fold_rows(elt, out_rows)


def _vmem_budget():
    """Generation-aware (target_input_block_bytes, vmem_limit_cap_bytes)."""
    cap = 64 << 20  # conservative default: v7x has 64 MiB VMEM per TensorCore
    try:
        info = pltpu.get_tpu_info()
        cap = int(getattr(info, "vmem_capacity_bytes", cap))
    except Exception:
        pass
    if cap >= (96 << 20):          # v5e / v6e: 128 MiB physical VMEM
        return 8 << 20, 96 << 20
    return 4 << 20, 48 << 20       # v7x (64 MiB per TC) or unknown: stay safe


def huber_loss(x, y, *, delta=1.0, reduction="mean", target_block_bytes=None):
    assert x.shape == y.shape, "input/target must have the same shape"
    assert x.ndim >= 2, "module spec sums over dim=1; need ndim >= 2"
    if not reduction:
        # TODO(synk): falsy reduction (per-dim-1-sum output, no final mean/sum)
        # is not wired up; only 'mean' / 'sum' (and 'none' -> sum, matching the
        # module's `if self.reduction:` quirk) are supported.
        raise NotImplementedError("reduction must be 'mean', 'sum' or 'none'")

    # Collapse leading dims, keep the trailing dim as lanes (layout-preserving:
    # the (8,128) tiling lives on the last two dims).
    x2 = x.reshape(-1, x.shape[-1])
    y2 = y.reshape(-1, y.shape[-1])
    n_rows, c = x2.shape
    itemsize = x2.dtype.itemsize

    tgt_default, vmem_cap = _vmem_budget()
    if target_block_bytes is None:
        target_block_bytes = tgt_default

    # Native sublane pack of the input dtype: 8 rows f32, 16 bf16, 32 int8.
    sub = max(8, 32 // max(1, itemsize))

    # Row-tile sizing: ~target_block_bytes per input block, multiple of `sub`.
    rows_budget = max(sub, (target_block_bytes // max(1, c * itemsize)) // sub * sub)
    if n_rows <= rows_budget:
        # Whole problem fits in one resident block; no masking needed.
        tile_rows = n_rows
        num_tiles = 1
        needs_mask = False
        out_rows = 8 if (n_rows >= 8 and n_rows % 8 == 0) else 1
    else:
        tile_rows = rows_budget
        num_tiles = pl.cdiv(n_rows, tile_rows)
        needs_mask = (num_tiles * tile_rows) != n_rows
        out_rows = 8
    # TODO(synk): no tiling along the last dim; extremely wide rows
    # (sub * C * itemsize >> target_block_bytes) would blow the VMEM budget.

    # VMEM: 2 inputs x 2 pipeline buffers + ~3 tile-sized f32 temps + headroom,
    # clamped to the generation-aware cap.
    in_block_bytes = tile_rows * c * itemsize
    vmem_limit = int(4 * in_block_bytes + 3 * tile_rows * c * 4 + (4 << 20))
    vmem_limit = max(16 << 20, min(vmem_limit, vmem_cap))

    kernel = functools.partial(
        _huber_partial_kernel, delta=float(delta), n_rows=n_rows,
        tile_rows=tile_rows, out_rows=out_rows, needs_mask=needs_mask)

    partials = pl.pallas_call(
        kernel,
        out_shape=jax.ShapeDtypeStruct((out_rows, c), jnp.float32),
        grid_spec=pltpu.PrefetchScalarGridSpec(
            num_scalar_prefetch=0,
            grid=(num_tiles,),
            in_specs=[
                pl.BlockSpec((tile_rows, c), lambda i: (i, 0)),
                pl.BlockSpec((tile_rows, c), lambda i: (i, 0)),
            ],
            out_specs=pl.BlockSpec((out_rows, c), lambda i: (0, 0)),
        ),
        compiler_params=pltpu.CompilerParams(
            # Single reduction axis onto a resident output block -> "arbitrary".
            # TODO(synk): on v7x, shard this axis across the two TensorCores
            # with pltpu.CORE_PARALLEL / pl.core_map to use both HBM streams.
            dimension_semantics=("arbitrary",),
            vmem_limit_bytes=vmem_limit,
        ),
    )(x2, y2)

    total = jnp.sum(partials)  # tiny (out_rows, C) collapse in XLA
    if reduction == "mean":
        # Module: mean over the per-dim-1 sums => divide by numel / shape[1].
        return total / jnp.float32(x.size // x.shape[1])
    return total  # 'sum' (and 'none', matching the module's truthy-string quirk)


def huber_loss_ref(x, y, delta=1.0, reduction="mean"):
    xf = x.astype(jnp.float32)
    yf = y.astype(jnp.float32)
    t = jnp.abs(xf - yf)
    elt = jnp.where(t <= delta, 0.5 * t * t, delta * (t - delta / 2))
    ret = jnp.sum(elt, axis=1)
    if reduction:
        ret = jnp.mean(ret) if reduction == "mean" else jnp.sum(ret)
    return ret


if __name__ == "__main__":
    key = jax.random.PRNGKey(0)
    configs = [
        ((16, 128), jnp.float32, "mean", None),       # aligned, single block
        ((50, 192), jnp.float32, "sum", None),        # ragged rows/lanes
        ((24, 256), jnp.bfloat16, "mean", None),      # bf16 through the DMA
        ((2, 4, 16), jnp.float32, "mean", None),      # ndim>2: sum(dim=1), mean
        ((300, 128), jnp.float32, "mean", 64 << 10),  # forces multi-tile + tail mask
        ((40, 128), jnp.float32, "none", None),       # module quirk: 'none' -> sum
    ]
    for shape, dtype, red, blk in configs:
        key, kx, ky = jax.random.split(key, 3)
        x = (2.0 * jax.random.normal(kx, shape, dtype=jnp.float32)).astype(dtype)
        y = (2.0 * jax.random.normal(ky, shape, dtype=jnp.float32)).astype(dtype)

        out = jax.block_until_ready(
            huber_loss(x, y, delta=1.0, reduction=red, target_block_bytes=blk))
        ref = huber_loss_ref(x, y, delta=1.0, reduction=red)
        assert jnp.allclose(out, ref, rtol=2e-5, atol=1e-3), (shape, dtype, red, out, ref)

    print("KERNEL_OK")
</pallas_src>

<mosaic_0001>
module attributes {stable_mosaic.version = 11 : i64} {
  func.func @_huber_partial_kernel(%arg0: i32, %arg1: memref<16x128xf32, #tpu.memory_space<vmem>>, %arg2: memref<16x128xf32, #tpu.memory_space<vmem>>, %arg3: memref<8x128xf32, #tpu.memory_space<vmem>>) attributes {dimension_semantics = [#tpu.dimension_semantics<arbitrary>], iteration_bounds = array<i64: 1>, scalar_prefetch = 0 : i64, scratch_operands = 0 : i64, tpu.core_type = #tpu.core_type<tc>, window_params = [{transform_indices = @transform_0, window_bounds = array<i64: 16, 128>}, {transform_indices = @transform_1, window_bounds = array<i64: 16, 128>}, {pipeline_mode = #tpu.pipeline_mode<synchronous>, transform_indices = @transform_2, window_bounds = array<i64: 8, 128>}]} {
    %c0_i32 = arith.constant 0 : i32
    %0 = arith.cmpi eq, %arg0, %c0_i32 : i32
    %1 = arith.extui %0 : i1 to i32
    %c0_i32_0 = arith.constant 0 : i32
    %2 = arith.cmpi ne, %1, %c0_i32_0 : i32
    scf.if %2 {
      %cst_10 = arith.constant 0.000000e+00 : f32
      %18 = vector.broadcast %cst_10 : f32 to vector<8x128xf32>
      %c0_11 = arith.constant 0 : index
      %c0_12 = arith.constant 0 : index
      %19 = vector.load %arg3[%c0_11, %c0_12] : memref<8x128xf32, #tpu.memory_space<vmem>>, vector<8x128xf32>
      tpu.vector_store %arg3[%c0_11, %c0_12], %18 {strides = array<i32>} : memref<8x128xf32, #tpu.memory_space<vmem>>, vector<8x128xf32>,
    } else {
    }
    %c0 = arith.constant 0 : index
    %c0_1 = arith.constant 0 : index
    %3 = vector.load %arg1[%c0, %c0_1] : memref<16x128xf32, #tpu.memory_space<vmem>>, vector<16x128xf32>
    %c0_2 = arith.constant 0 : index
    %c0_3 = arith.constant 0 : index
    %4 = vector.load %arg2[%c0_2, %c0_3] : memref<16x128xf32, #tpu.memory_space<vmem>>, vector<16x128xf32>
    %5 = arith.subf %3, %4 : vector<16x128xf32>
    %6 = math.absf %5 : vector<16x128xf32>
    %cst = arith.constant 1.000000e+00 : f32
    %7 = vector.broadcast %cst : f32 to vector<16x128xf32>
    %8 = arith.minimumf %6, %7 : vector<16x128xf32>
    %cst_4 = arith.constant 5.000000e-01 : f32
    %9 = vector.broadcast %cst_4 : f32 to vector<16x128xf32>
    %10 = arith.mulf %9, %8 : vector<16x128xf32>
    %11 = arith.subf %6, %10 : vector<16x128xf32>
    %12 = arith.mulf %8, %11 : vector<16x128xf32>
    %c0_5 = arith.constant 0 : index
    %c0_6 = arith.constant 0 : index
    %13 = vector.load %arg3[%c0_5, %c0_6] : memref<8x128xf32, #tpu.memory_space<vmem>>, vector<8x128xf32>
    %14 = vector.shape_cast %12 : vector<16x128xf32> to vector<2x8x128xf32>
    %cst_7 = arith.constant dense<0.000000e+00> : vector<8x128xf32>
    %15 = vector.multi_reduction <add>, %14, %cst_7 [0] : vector<2x8x128xf32> to vector<8x128xf32>
    %16 = arith.addf %13, %15 : vector<8x128xf32>
    %c0_8 = arith.constant 0 : index
    %c0_9 = arith.constant 0 : index
    %17 = vector.load %arg3[%c0_8, %c0_9] : memref<8x128xf32, #tpu.memory_space<vmem>>, vector<8x128xf32>
    tpu.vector_store %arg3[%c0_8, %c0_9], %16 {strides = array<i32>} : memref<8x128xf32, #tpu.memory_space<vmem>>, vector<8x128xf32>,
    return
  }
  func.func @transform_0(%arg0: i32) -> (i32, i32) {
    %c0_i32 = arith.constant 0 : i32
    %c0_i32_0 = arith.constant 0 : i32
    return %arg0, %c0_i32 : i32, i32
  }
  func.func @transform_1(%arg0: i32) -> (i32, i32) {
    %c0_i32 = arith.constant 0 : i32
    %c0_i32_0 = arith.constant 0 : i32
    return %arg0, %c0_i32 : i32, i32
  }
  func.func @transform_2(%arg0: i32) -> (i32, i32) {
    %c0_i32 = arith.constant 0 : i32
    %c0_i32_0 = arith.constant 0 : i32
    %c0_i32_1 = arith.constant 0 : i32
    return %c0_i32, %c0_i32_0 : i32, i32
  }
}

</mosaic_0001>

<llo_original>
// kernel: tpu_custom_call.1
$region0: #{tpu_custom_call.1}
  #allocation0 [shape = 'u32[]', space=smem, size = 0x4, offset = 0x4, fixed_abs, tag = 'smem constant byte address 0x4 - core index']
  #allocation1 [shape = 'u32[72,128]{1,0:T(1,128)}', space=vmem, size = 0x9000, scoped, tag = 'internal scratch']
  %s0 = inlined_call_operand.hbm [shape: f32[16,128], index: 0, kind: input, shape index: {}]
  %s1 = inlined_call_operand.hbm [shape: f32[16,128], index: 1, kind: input, shape index: {}]
  %s2 = inlined_call_operand.hbm [shape: f32[8,128], index: 2, kind: output, shape index: {}]
  %s3 = sld [smem:[#allocation0]]
  $region30: #{tpu_custom_call.1} parent=0
    _
  %s5 = ssub.s32 1, %s3
  %s6 = scalar_select 0, %s5, %s3
  $region1: #{tpu_custom_call.1} parent=0
    #allocation2 [shape = 'u8[8192]{0}', space=vmem, size = 0x2000, scoped, tag = 'input window, operand 0, single buffered']
    #allocation3 [shape = 's32[1]{0}', space=sflag, size = 0x4, scoped, tag = 'scoped memory for tpu_custom_call.1']
    #allocation4 [shape = 's32[1]{0}', space=sflag, size = 0x4, scoped, tag = 'scoped memory for tpu_custom_call.1']
    #allocation5 [shape = 'u8[8192]{0}', space=vmem, size = 0x2000, scoped, tag = 'input window, operand 1, single buffered']
    #allocation6 [shape = 's32[1]{0}', space=sflag, size = 0x4, scoped, tag = 'scoped memory for tpu_custom_call.1']
    #allocation7 [shape = 'u8[4096]{0}', space=vmem, size = 0x1000, scoped, tag = 'output window, operand 0, single buffered']
    %7 = vsyncpa [#allocation3], 0
    %8 = vsyncpa [#allocation6], 0
    %9 = vsyncpa [#allocation4], 0
    // Predicated region
    $region2: #{tpu_custom_call.1} parent=1 // pred_check
      _
    $region3: #{tpu_custom_call.1} parent=1 // pred_check_branch
      %11 = sbr.rel (0) target = $region5
    $region4: #{tpu_custom_call.1} parent=1 // pred_region
      %13 = vsyncadd [#allocation3], 0
      %s14 = sshll.u32 %s0, 4
      %s15 = int_to_ptr.hbm [resolvable:$true] %s14
      %s16 = sshll.u32 [#allocation2], 4
      %s17 = int_to_ptr.vmem [resolvable:$true] %s16
      %22 = dma.hbm_to_vmem [thread:$0]  %s15, 256, %s17, [#allocation3], 128, 128, 8
    $region5: #{tpu_custom_call.1} parent=1 // pred_fallthru
      _
    // Predicated region
    $region6: #{tpu_custom_call.1} parent=1 // pred_check
      _
    $region7: #{tpu_custom_call.1} parent=1 // pred_check_branch
      %24 = sbr.rel (0) target = $region9
    $region8: #{tpu_custom_call.1} parent=1 // pred_region
      %26 = vsyncadd [#allocation6], 0
      %s27 = sshll.u32 %s1, 4
      %s28 = int_to_ptr.hbm [resolvable:$true] %s27
      %s29 = sshll.u32 [#allocation5], 4
      %s30 = int_to_ptr.vmem [resolvable:$true] %s29
      %35 = dma.hbm_to_vmem [thread:$0]  %s28, 256, %s30, [#allocation6], 128, 128, 8
    $region9: #{tpu_custom_call.1} parent=1 // pred_fallthru
      _
    // Predicated region
    $region10: #{tpu_custom_call.1} parent=1 // pred_check
      _
    $region11: #{tpu_custom_call.1} parent=1 // pred_check_branch
      %37 = sbr.rel (0) target = $region13
    $region12: #{tpu_custom_call.1} parent=1 // pred_region
      %39 = dma.done [#allocation3], 256
    $region13: #{tpu_custom_call.1} parent=1 // pred_fallthru
      _
    // Predicated region
    $region14: #{tpu_custom_call.1} parent=1 // pred_check
      _
    $region15: #{tpu_custom_call.1} parent=1 // pred_check_branch
      %41 = sbr.rel (0) target = $region17
    $region16: #{tpu_custom_call.1} parent=1 // pred_region
      %43 = dma.done [#allocation6], 256
    $region17: #{tpu_custom_call.1} parent=1 // pred_fallthru
      _
    %p44 = scmp.eq.s32.totalorder 0, 0
    // Predicated region
    $region18: #{tpu_custom_call.1} parent=1 // pred_check
      %p45 = pneg %p44
    $region19: #{tpu_custom_call.1} parent=1 // pred_check_branch
      %47 = sbr.rel (%p45) target = $region21
    $region20: #{tpu_custom_call.1} parent=1 // pred_region
      %48 = vst [vmem:[#allocation7] sm:$0xff] 0.0
    $region21: #{tpu_custom_call.1} parent=1 // pred_fallthru
      _
    %v49 = vld [vmem:[#allocation2] sm:$0xff]
    %v50 = vld [vmem:[#allocation2 + $0x8] sm:$0xff]
    %v51 = vld [vmem:[#allocation5] sm:$0xff]
    %v52 = vld [vmem:[#allocation5 + $0x8] sm:$0xff]
    %v53 = vsub.f32 %v49, %v51
    %v54 = vsub.f32 %v50, %v52
    %v55 = vand.u32 2147483647, %v53
    %v56 = vand.u32 2147483647, %v54
    %v57 = vmin.f32 %v55, 1.0
    %v58 = vmin.f32 %v56, 1.0
    %v59 = vmul.f32 %v57, 0.5
    %v60 = vmul.f32 %v58, 0.5
    %v61 = vsub.f32 %v55, %v59
    %v62 = vsub.f32 %v56, %v60
    %v63 = vmul.f32 %v57, %v61
    %v64 = vmul.f32 %v58, %v62
    %v65 = vld [vmem:[#allocation7] sm:$0xff]
    %v66 = vadd.f32 %v63, %v64
    %v67 = vadd.f32 %v65, %v66
    %68 = vst [vmem:[#allocation7] sm:$0xff] %v67
    // Predicated region
    $region22: #{tpu_custom_call.1} parent=1 // pred_check
      _
    $region23: #{tpu_custom_call.1} parent=1 // pred_check_branch
      %70 = sbr.rel (0) target = $region25
    $region24: #{tpu_custom_call.1} parent=1 // pred_region
      %72 = vsyncadd [#allocation4], 0
      %s74 = sshll.u32 [#allocation7], 4
      %s75 = int_to_ptr.vmem [resolvable:$true] %s74
      %s76 = sshll.u32 %s2, 4
      %s77 = int_to_ptr.hbm [resolvable:$true] %s76
      %79 = dma.vmem_to_hbm [thread:$0]  %s75, 128, %s77, [#allocation4]
    $region25: #{tpu_custom_call.1} parent=1 // pred_fallthru
      _
    // Predicated region
    $region26: #{tpu_custom_call.1} parent=1 // pred_check
      _
    $region27: #{tpu_custom_call.1} parent=1 // pred_check_branch
      %81 = sbr.rel (0) target = $region29
    $region28: #{tpu_custom_call.1} parent=1 // pred_region
      %83 = dma.done [#allocation4], 128
    $region29: #{tpu_custom_call.1} parent=1 // pred_fallthru
      _
    %84 = vsyncpa [#allocation3], 1
    %85 = vsyncpa [#allocation6], 1
    %86 = vsyncpa [#allocation4], 1

</llo_original>
